<compile_context>
chip_gen: v6e
topology: v6e:2x2x1
jax: 0.10.0
libtpu: 0.0.40
codegen_flags: <defaults>
</compile_context>

<pallas_src>
import jax
import jax.numpy as jnp
from jax.experimental import pallas as pl
from jax.experimental.pallas import tpu as pltpu

NEG_SLOPE = 0.01  # nn.LeakyReLU() default


def _leaky_relu(x):
    # f32 compare/select on the VPU (safe on v5e which has no bf16 VPU path).
    return jnp.where(x > 0, x, NEG_SLOPE * x)


def _round_up(n, m):
    return ((n + m - 1) // m) * m


def _pad_to(a, shape):
    pads = [(0, s - d) for d, s in zip(a.shape, shape)]
    if any(p[1] for p in pads):
        return jnp.pad(a, pads)
    return a


def ffn3_kernel(x_ref, w1_ref, b1_ref, w2_ref, b2_ref, w3_ref, b3_ref, o_ref):
    # fc1: bf16 operands, f32 accumulate; bias + LeakyReLU in f32.
    h = jnp.dot(x_ref[...], w1_ref[...], preferred_element_type=jnp.float32)
    h = _leaky_relu(h + b1_ref[...])
    # fc2
    h = jnp.dot(h.astype(w2_ref.dtype), w2_ref[...],
                preferred_element_type=jnp.float32)
    h = _leaky_relu(h + b2_ref[...])
    # fc3 (no activation); dropout = identity in eval mode.
    out = jnp.dot(h.astype(w3_ref.dtype), w3_ref[...],
                  preferred_element_type=jnp.float32) + b3_ref[...]
    o_ref[...] = out.astype(o_ref.dtype)  # lane-dense (padded-to-128) store


def ffn3_forward(x, w1, b1, w2, b2, w3, b3, *, block_b=256,
                 compute_dtype=jnp.bfloat16):
    """Fused 3-layer MLP. Weights stored as [in, out]; biases as [1, out]."""
    B, d_in = x.shape
    h1 = w1.shape[1]
    h2 = w2.shape[1]
    d_out = w3.shape[1]

    # Lane-dense padding of every feature dim.
    d_in_p = _round_up(d_in, 128)
    h1_p = _round_up(h1, 128)
    h2_p = _round_up(h2, 128)
    d_out_p = _round_up(d_out, 128)

    # Batch tile: sublane-aligned, as large as reasonable (big tiles amortize
    # the ~0.35us/step overhead; weights are tiny so VMEM is not a constraint,
    # including v7x's 64 MiB).
    tb = min(block_b, _round_up(B, 8))
    b_p = _round_up(B, tb)
    nb = b_p // tb

    # Zero-pad once, outside the kernel. Padded lanes stay exactly zero through
    # every layer (zero weight rows/cols, zero bias lanes), so slicing at the
    # end recovers the exact result.
    xp = _pad_to(x, (b_p, d_in_p)).astype(compute_dtype)
    w1p = _pad_to(w1, (d_in_p, h1_p)).astype(compute_dtype)
    w2p = _pad_to(w2, (h1_p, h2_p)).astype(compute_dtype)
    w3p = _pad_to(w3, (h2_p, d_out_p)).astype(compute_dtype)
    b1p = _pad_to(b1, (1, h1_p)).astype(jnp.float32)
    b2p = _pad_to(b2, (1, h2_p)).astype(jnp.float32)
    b3p = _pad_to(b3, (1, d_out_p)).astype(jnp.float32)

    flops = 2 * B * (d_in * h1 + h1 * h2 + h2 * d_out)
    bytes_accessed = (
        (xp.size + w1p.size + w2p.size + w3p.size) * 2  # bf16 operands
        + (b1p.size + b2p.size + b3p.size) * 4           # f32 biases
        + b_p * d_out_p * 4                              # f32 output
    )

    out = pl.pallas_call(
        ffn3_kernel,
        out_shape=jax.ShapeDtypeStruct((b_p, d_out_p), jnp.float32),
        grid=(nb,),
        in_specs=[
            pl.BlockSpec((tb, d_in_p), lambda i: (i, 0)),       # x: tiled on batch
            pl.BlockSpec((d_in_p, h1_p), lambda i: (0, 0)),     # weights/biases:
            pl.BlockSpec((1, h1_p), lambda i: (0, 0)),          # VMEM-resident
            pl.BlockSpec((h1_p, h2_p), lambda i: (0, 0)),       # across the grid
            pl.BlockSpec((1, h2_p), lambda i: (0, 0)),
            pl.BlockSpec((h2_p, d_out_p), lambda i: (0, 0)),
            pl.BlockSpec((1, d_out_p), lambda i: (0, 0)),
        ],
        out_specs=pl.BlockSpec((tb, d_out_p), lambda i: (i, 0)),
        compiler_params=pltpu.CompilerParams(
            dimension_semantics=("parallel",),  # megacore sharding on v7x
        ),
        cost_estimate=pl.CostEstimate(
            flops=int(flops), transcendentals=0,
            bytes_accessed=int(bytes_accessed)),
    )(xp, w1p, b1p, w2p, b2p, w3p, b3p)

    return out[:B, :d_out].astype(x.dtype)


def init_linear_params(key, fan_in, fan_out, dtype=jnp.float32):
    """Deterministic init matching nn.Linear's U(-1/sqrt(fan_in), 1/sqrt(fan_in))."""
    kw, kb = jax.random.split(key)
    bound = 1.0 / (fan_in ** 0.5)
    # stored as [in, out] so the kernel does x @ W
    w = jax.random.uniform(kw, (fan_in, fan_out), dtype, minval=-bound, maxval=bound)
    b = jax.random.uniform(kb, (1, fan_out), dtype, minval=-bound, maxval=bound)
    return w, b


def reference_forward(x, w1, b1, w2, b2, w3, b3, compute_dtype=jnp.bfloat16):
    """Pure-JAX reference matching the kernel's numerics (bf16 ops, f32 accum)."""
    def mm(a, w):
        return jnp.dot(a.astype(compute_dtype), w.astype(compute_dtype),
                       preferred_element_type=jnp.float32)
    h = _leaky_relu(mm(x, w1) + b1)
    h = _leaky_relu(mm(h, w2) + b2)
    return mm(h, w3) + b3


if __name__ == "__main__":
    # Small shapes consistent with the module's forward:
    # x: [batch, input_size] = [8, 32]; hidden1=64, hidden2=64, output=16
    batch, input_size, hidden1, hidden2, output_size = 8, 32, 64, 64, 16

    key = jax.random.PRNGKey(0)
    kx, k1, k2, k3 = jax.random.split(key, 4)

    x = jax.random.normal(kx, (batch, input_size), jnp.float32)
    w1, b1 = init_linear_params(k1, input_size, hidden1)
    w2, b2 = init_linear_params(k2, hidden1, hidden2)
    w3, b3 = init_linear_params(k3, hidden2, output_size)

    out = jax.block_until_ready(ffn3_forward(x, w1, b1, w2, b2, w3, b3))

    ref = reference_forward(x, w1, b1, w2, b2, w3, b3)        # same bf16/f32 path
    ref_f32 = reference_forward(x, w1, b1, w2, b2, w3, b3,
                                compute_dtype=jnp.float32)    # sanity check
    assert out.shape == (batch, output_size), out.shape
    assert jnp.allclose(out, ref, atol=2e-3, rtol=2e-3), "mismatch vs bf16 reference"
    assert jnp.allclose(out, ref_f32, atol=5e-2, rtol=5e-2), "mismatch vs f32 reference"

    print("KERNEL_OK")
</pallas_src>

<mosaic_0001>
module attributes {stable_mosaic.version = 11 : i64} {
  func.func @ffn3_kernel(%arg0: i32, %arg1: memref<8x128xbf16, #tpu.memory_space<vmem>>, %arg2: memref<128x128xbf16, #tpu.memory_space<vmem>>, %arg3: memref<1x128xf32, #tpu.memory_space<vmem>>, %arg4: memref<128x128xbf16, #tpu.memory_space<vmem>>, %arg5: memref<1x128xf32, #tpu.memory_space<vmem>>, %arg6: memref<128x128xbf16, #tpu.memory_space<vmem>>, %arg7: memref<1x128xf32, #tpu.memory_space<vmem>>, %arg8: memref<8x128xf32, #tpu.memory_space<vmem>>) attributes {dimension_semantics = [#tpu.dimension_semantics<parallel>], iteration_bounds = array<i64: 1>, scalar_prefetch = 0 : i64, scratch_operands = 0 : i64, tpu.core_type = #tpu.core_type<tc>, window_params = [{transform_indices = @transform_0, window_bounds = array<i64: 8, 128>}, {pipeline_mode = #tpu.pipeline_mode<synchronous>, transform_indices = @transform_1, window_bounds = array<i64: 128, 128>}, {pipeline_mode = #tpu.pipeline_mode<synchronous>, transform_indices = @transform_2, window_bounds = array<i64: 1, 128>}, {pipeline_mode = #tpu.pipeline_mode<synchronous>, transform_indices = @transform_3, window_bounds = array<i64: 128, 128>}, {pipeline_mode = #tpu.pipeline_mode<synchronous>, transform_indices = @transform_4, window_bounds = array<i64: 1, 128>}, {pipeline_mode = #tpu.pipeline_mode<synchronous>, transform_indices = @transform_5, window_bounds = array<i64: 128, 128>}, {pipeline_mode = #tpu.pipeline_mode<synchronous>, transform_indices = @transform_6, window_bounds = array<i64: 1, 128>}, {transform_indices = @transform_7, window_bounds = array<i64: 8, 128>}]} {
    %c0 = arith.constant 0 : index
    %c0_0 = arith.constant 0 : index
    %0 = vector.load %arg1[%c0, %c0_0] : memref<8x128xbf16, #tpu.memory_space<vmem>>, vector<8x128xbf16>
    %c0_1 = arith.constant 0 : index
    %c0_2 = arith.constant 0 : index
    %1 = vector.load %arg2[%c0_1, %c0_2] : memref<128x128xbf16, #tpu.memory_space<vmem>>, vector<128x128xbf16>
    %cst = arith.constant dense<0.000000e+00> : vector<8x128xf32>
    %2 = tpu.matmul %0, %1, %cst {dimension_numbers = #tpu.dot_dimension_numbers<[1], [0], [0], [1], [0, 0, 1, 1], [], []>} : vector<8x128xbf16>, vector<128x128xbf16>, vector<8x128xf32> -> vector<8x128xf32>
    %c0_3 = arith.constant 0 : index
    %c0_4 = arith.constant 0 : index
    %3 = vector.load %arg3[%c0_3, %c0_4] : memref<1x128xf32, #tpu.memory_space<vmem>>, vector<1x128xf32>
    %4 = vector.broadcast %3 : vector<1x128xf32> to vector<8x128xf32>
    %5 = arith.addf %2, %4 : vector<8x128xf32>
    %cst_5 = arith.constant 0.000000e+00 : f32
    %6 = vector.broadcast %cst_5 : f32 to vector<8x128xf32>
    %7 = arith.cmpf ogt, %5, %6 : vector<8x128xf32>
    %cst_6 = arith.constant 0.00999999977 : f32
    %8 = vector.broadcast %cst_6 : f32 to vector<8x128xf32>
    %9 = arith.mulf %8, %5 : vector<8x128xf32>
    %10 = arith.select %7, %5, %9 : vector<8x128xi1>, vector<8x128xf32>
    %11 = arith.truncf %10 : vector<8x128xf32> to vector<8x128xbf16>
    %c0_7 = arith.constant 0 : index
    %c0_8 = arith.constant 0 : index
    %12 = vector.load %arg4[%c0_7, %c0_8] : memref<128x128xbf16, #tpu.memory_space<vmem>>, vector<128x128xbf16>
    %cst_9 = arith.constant dense<0.000000e+00> : vector<8x128xf32>
    %13 = tpu.matmul %11, %12, %cst_9 {dimension_numbers = #tpu.dot_dimension_numbers<[1], [0], [0], [1], [0, 0, 1, 1], [], []>} : vector<8x128xbf16>, vector<128x128xbf16>, vector<8x128xf32> -> vector<8x128xf32>
    %c0_10 = arith.constant 0 : index
    %c0_11 = arith.constant 0 : index
    %14 = vector.load %arg5[%c0_10, %c0_11] : memref<1x128xf32, #tpu.memory_space<vmem>>, vector<1x128xf32>
    %15 = vector.broadcast %14 : vector<1x128xf32> to vector<8x128xf32>
    %16 = arith.addf %13, %15 : vector<8x128xf32>
    %cst_12 = arith.constant 0.000000e+00 : f32
    %17 = vector.broadcast %cst_12 : f32 to vector<8x128xf32>
    %18 = arith.cmpf ogt, %16, %17 : vector<8x128xf32>
    %cst_13 = arith.constant 0.00999999977 : f32
    %19 = vector.broadcast %cst_13 : f32 to vector<8x128xf32>
    %20 = arith.mulf %19, %16 : vector<8x128xf32>
    %21 = arith.select %18, %16, %20 : vector<8x128xi1>, vector<8x128xf32>
    %22 = arith.truncf %21 : vector<8x128xf32> to vector<8x128xbf16>
    %c0_14 = arith.constant 0 : index
    %c0_15 = arith.constant 0 : index
    %23 = vector.load %arg6[%c0_14, %c0_15] : memref<128x128xbf16, #tpu.memory_space<vmem>>, vector<128x128xbf16>
    %cst_16 = arith.constant dense<0.000000e+00> : vector<8x128xf32>
    %24 = tpu.matmul %22, %23, %cst_16 {dimension_numbers = #tpu.dot_dimension_numbers<[1], [0], [0], [1], [0, 0, 1, 1], [], []>} : vector<8x128xbf16>, vector<128x128xbf16>, vector<8x128xf32> -> vector<8x128xf32>
    %c0_17 = arith.constant 0 : index
    %c0_18 = arith.constant 0 : index
    %25 = vector.load %arg7[%c0_17, %c0_18] : memref<1x128xf32, #tpu.memory_space<vmem>>, vector<1x128xf32>
    %26 = vector.broadcast %25 : vector<1x128xf32> to vector<8x128xf32>
    %27 = arith.addf %24, %26 : vector<8x128xf32>
    %c0_19 = arith.constant 0 : index
    %c0_20 = arith.constant 0 : index
    %28 = vector.load %arg8[%c0_19, %c0_20] : memref<8x128xf32, #tpu.memory_space<vmem>>, vector<8x128xf32>
    tpu.vector_store %arg8[%c0_19, %c0_20], %27 {strides = array<i32>} : memref<8x128xf32, #tpu.memory_space<vmem>>, vector<8x128xf32>,
    return
  }
  func.func @transform_0(%arg0: i32) -> (i32, i32) {
    %c0_i32 = arith.constant 0 : i32
    %c0_i32_0 = arith.constant 0 : i32
    return %arg0, %c0_i32 : i32, i32
  }
  func.func @transform_1(%arg0: i32) -> (i32, i32) {
    %c0_i32 = arith.constant 0 : i32
    %c0_i32_0 = arith.constant 0 : i32
    %c0_i32_1 = arith.constant 0 : i32
    return %c0_i32, %c0_i32_0 : i32, i32
  }
  func.func @transform_2(%arg0: i32) -> (i32, i32) {
    %c0_i32 = arith.constant 0 : i32
    %c0_i32_0 = arith.constant 0 : i32
    %c0_i32_1 = arith.constant 0 : i32
    return %c0_i32, %c0_i32_0 : i32, i32
  }
  func.func @transform_3(%arg0: i32) -> (i32, i32) {
    %c0_i32 = arith.constant 0 : i32
    %c0_i32_0 = arith.constant 0 : i32
    %c0_i32_1 = arith.constant 0 : i32
    return %c0_i32, %c0_i32_0 : i32, i32
  }
  func.func @transform_4(%arg0: i32) -> (i32, i32) {
    %c0_i32 = arith.constant 0 : i32
    %c0_i32_0 = arith.constant 0 : i32
    %c0_i32_1 = arith.constant 0 : i32
    return %c0_i32, %c0_i32_0 : i32, i32
  }
  func.func @transform_5(%arg0: i32) -> (i32, i32) {
    %c0_i32 = arith.constant 0 : i32
    %c0_i32_0 = arith.constant 0 : i32
    %c0_i32_1 = arith.constant 0 : i32
    return %c0_i32, %c0_i32_0 : i32, i32
  }
  func.func @transform_6(%arg0: i32) -> (i32, i32) {
    %c0_i32 = arith.constant 0 : i32
    %c0_i32_0 = arith.constant 0 : i32
    %c0_i32_1 = arith.constant 0 : i32
    return %c0_i32, %c0_i32_0 : i32, i32
  }
  func.func @transform_7(%arg0: i32) -> (i32, i32) {
    %c0_i32 = arith.constant 0 : i32
    %c0_i32_0 = arith.constant 0 : i32
    return %arg0, %c0_i32 : i32, i32
  }
}

</mosaic_0001>

<llo_original>
// kernel: tpu_custom_call.1
$region0: #{tpu_custom_call.1}
  #allocation0 [shape = 'u32[]', space=smem, size = 0x4, offset = 0x4, fixed_abs, tag = 'smem constant byte address 0x4 - core index']
  #allocation1 [shape = 'u32[144,128]{1,0:T(1,128)}', space=vmem, size = 0x12000, scoped, tag = 'internal scratch']
  %s0 = inlined_call_operand.hbm [shape: bf16[8,128], index: 0, kind: input, shape index: {}]
  %s1 = inlined_call_operand.hbm [shape: bf16[128,128], index: 1, kind: input, shape index: {}]
  %s2 = inlined_call_operand.vmem [shape: f32[1,128], index: 2, kind: input, shape index: {}]
  %s3 = inlined_call_operand.hbm [shape: bf16[128,128], index: 3, kind: input, shape index: {}]
  %s4 = inlined_call_operand.vmem [shape: f32[1,128], index: 4, kind: input, shape index: {}]
  %s5 = inlined_call_operand.hbm [shape: bf16[128,128], index: 5, kind: input, shape index: {}]
  %s6 = inlined_call_operand.vmem [shape: f32[1,128], index: 6, kind: input, shape index: {}]
  %s7 = inlined_call_operand.hbm [shape: f32[8,128], index: 7, kind: output, shape index: {}]
  %s8 = sld [smem:[#allocation0]]
  $region54: #{tpu_custom_call.1} parent=0
    _
  %s10 = ssub.s32 1, %s8
  %s11 = scalar_select 0, %s10, %s8
  $region1: #{tpu_custom_call.1} parent=0
    #allocation2 [shape = 'u8[2048]{0}', space=vmem, size = 0x800, scoped, tag = 'input window, operand 0, single buffered']
    #allocation3 [shape = 's32[1]{0}', space=sflag, size = 0x4, scoped, tag = 'scoped memory for tpu_custom_call.1']
    #allocation4 [shape = 's32[1]{0}', space=sflag, size = 0x4, scoped, tag = 'scoped memory for tpu_custom_call.1']
    #allocation5 [shape = 'u8[32768]{0}', space=vmem, size = 0x8000, scoped, tag = 'input window, operand 1, single buffered']
    #allocation6 [shape = 's32[1]{0}', space=sflag, size = 0x4, scoped, tag = 'scoped memory for tpu_custom_call.1']
    #allocation7 [shape = 'u8[32768]{0}', space=vmem, size = 0x8000, scoped, tag = 'input window, operand 3, single buffered']
    #allocation8 [shape = 'u8[32768]{0}', space=vmem, size = 0x8000, scoped, tag = 'input window, operand 5, single buffered']
    #allocation9 [shape = 's32[1]{0}', space=sflag, size = 0x4, scoped, tag = 'scoped memory for tpu_custom_call.1']
    #allocation10 [shape = 'u8[4096]{0}', space=vmem, size = 0x1000, scoped, tag = 'output window, operand 0, single buffered']
    %12 = vsyncpa [#allocation3], 0
    %13 = vsyncpa [#allocation6], 0
    %14 = vsyncpa [#allocation9], 0
    %15 = vsyncpa [#allocation4], 0
    // Predicated region
    $region2: #{tpu_custom_call.1} parent=1 // pred_check
      _
    $region3: #{tpu_custom_call.1} parent=1 // pred_check_branch
      %17 = sbr.rel (0) target = $region5
    $region4: #{tpu_custom_call.1} parent=1 // pred_region
      %s19 = ssub.s32 64, 64
      %20 = vsyncadd [#allocation3], %s19
      %s22 = sshll.u32 [#allocation2], 4
      %s23 = int_to_ptr.vmem [resolvable:$true] %s22
      %25 = dma.hbm_to_vmem [thread:$0]  %s0, 64, %s23, [#allocation3]
    $region5: #{tpu_custom_call.1} parent=1 // pred_fallthru
      _
    // Predicated region
    $region6: #{tpu_custom_call.1} parent=1 // pred_check
      _
    $region7: #{tpu_custom_call.1} parent=1 // pred_check_branch
      %27 = sbr.rel (0) target = $region9
    $region8: #{tpu_custom_call.1} parent=1 // pred_region
      %s29 = ssub.s32 1024, 1024
      %30 = vsyncadd [#allocation6], %s29
      %s31 = sshll.u32 [#allocation5], 4
      %s32 = int_to_ptr.vmem [resolvable:$true] %s31
      %37 = dma.hbm_to_vmem [thread:$0]  %s1, 1024, %s32, [#allocation6], 64, 64, 4
    $region9: #{tpu_custom_call.1} parent=1 // pred_fallthru
      _
    // Predicated region
    $region10: #{tpu_custom_call.1} parent=1 // pred_check
      _
    $region11: #{tpu_custom_call.1} parent=1 // pred_check_branch
      %39 = sbr.rel (0) target = $region13
    $region12: #{tpu_custom_call.1} parent=1 // pred_region
      _
    $region13: #{tpu_custom_call.1} parent=1 // pred_fallthru
      _
    // Predicated region
    $region14: #{tpu_custom_call.1} parent=1 // pred_check
      _
    $region15: #{tpu_custom_call.1} parent=1 // pred_check_branch
      %41 = sbr.rel (0) target = $region17
    $region16: #{tpu_custom_call.1} parent=1 // pred_region
      %s43 = ssub.s32 1024, 1024
      %44 = vsyncadd [#allocation6], %s43
      %s45 = sshll.u32 [#allocation7], 4
      %s46 = int_to_ptr.vmem [resolvable:$true] %s45
      %51 = dma.hbm_to_vmem [thread:$0]  %s3, 1024, %s46, [#allocation6], 64, 64, 4
    $region17: #{tpu_custom_call.1} parent=1 // pred_fallthru
      _
    // Predicated region
    $region18: #{tpu_custom_call.1} parent=1 // pred_check
      _
    $region19: #{tpu_custom_call.1} parent=1 // pred_check_branch
      %53 = sbr.rel (0) target = $region21
    $region20: #{tpu_custom_call.1} parent=1 // pred_region
      _
    $region21: #{tpu_custom_call.1} parent=1 // pred_fallthru
      _
    // Predicated region
    $region22: #{tpu_custom_call.1} parent=1 // pred_check
      _
    $region23: #{tpu_custom_call.1} parent=1 // pred_check_branch
      %55 = sbr.rel (0) target = $region25
    $region24: #{tpu_custom_call.1} parent=1 // pred_region
      %s57 = ssub.s32 1024, 1024
      %58 = vsyncadd [#allocation9], %s57
      %s59 = sshll.u32 [#allocation8], 4
      %s60 = int_to_ptr.vmem [resolvable:$true] %s59
      %65 = dma.hbm_to_vmem [thread:$0]  %s5, 1024, %s60, [#allocation9], 64, 64, 4
    $region25: #{tpu_custom_call.1} parent=1 // pred_fallthru
      _
    // Predicated region
    $region26: #{tpu_custom_call.1} parent=1 // pred_check
      _
    $region27: #{tpu_custom_call.1} parent=1 // pred_check_branch
      %67 = sbr.rel (0) target = $region29
    $region28: #{tpu_custom_call.1} parent=1 // pred_region
      _
    $region29: #{tpu_custom_call.1} parent=1 // pred_fallthru
      _
    // Predicated region
    $region30: #{tpu_custom_call.1} parent=1 // pred_check
      _
    $region31: #{tpu_custom_call.1} parent=1 // pred_check_branch
      %69 = sbr.rel (0) target = $region33
    $region32: #{tpu_custom_call.1} parent=1 // pred_region
      %70 = dma.done [#allocation3], 64
    $region33: #{tpu_custom_call.1} parent=1 // pred_fallthru
      _
    // Predicated region
    $region34: #{tpu_custom_call.1} parent=1 // pred_check
      _
    $region35: #{tpu_custom_call.1} parent=1 // pred_check_branch
      %72 = sbr.rel (0) target = $region37
    $region36: #{tpu_custom_call.1} parent=1 // pred_region
      %73 = dma.done [#allocation6], 1024
    $region37: #{tpu_custom_call.1} parent=1 // pred_fallthru
      _
    // Predicated region
    $region38: #{tpu_custom_call.1} parent=1 // pred_check
      _
    $region39: #{tpu_custom_call.1} parent=1 // pred_check_branch
      %75 = sbr.rel (0) target = $region41
    $region40: #{tpu_custom_call.1} parent=1 // pred_region
      %76 = dma.done [#allocation6], 1024
    $region41: #{tpu_custom_call.1} parent=1 // pred_fallthru
      _
    // Predicated region
    $region42: #{tpu_custom_call.1} parent=1 // pred_check
      _
    $region43: #{tpu_custom_call.1} parent=1 // pred_check_branch
      %78 = sbr.rel (0) target = $region45
    $region44: #{tpu_custom_call.1} parent=1 // pred_region
      %79 = dma.done [#allocation9], 1024
    $region45: #{tpu_custom_call.1} parent=1 // pred_fallthru
      _
    %v81 = vld [vmem:[#allocation2] sm:$0xf]
    %v82 = vld [vmem:[#allocation5] sm:$0xf]
    %v83 = vld [vmem:[#allocation5 + $0x4] sm:$0xf]
    %v84 = vld [vmem:[#allocation5 + $0x8] sm:$0xf]
    %v85 = vld [vmem:[#allocation5 + $0xc] sm:$0xf]
    %v86 = vld [vmem:[#allocation5 + $0x10] sm:$0xf]
    %v87 = vld [vmem:[#allocation5 + $0x14] sm:$0xf]
    %v88 = vld [vmem:[#allocation5 + $0x18] sm:$0xf]
    %v89 = vld [vmem:[#allocation5 + $0x1c] sm:$0xf]
    %v90 = vld [vmem:[#allocation5 + $0x20] sm:$0xf]
    %v91 = vld [vmem:[#allocation5 + $0x24] sm:$0xf]
    %v92 = vld [vmem:[#allocation5 + $0x28] sm:$0xf]
    %v93 = vld [vmem:[#allocation5 + $0x2c] sm:$0xf]
    %v94 = vld [vmem:[#allocation5 + $0x30] sm:$0xf]
    %v95 = vld [vmem:[#allocation5 + $0x34] sm:$0xf]
    %v96 = vld [vmem:[#allocation5 + $0x38] sm:$0xf]
    %v97 = vld [vmem:[#allocation5 + $0x3c] sm:$0xf]
    %v98 = vld [vmem:[%s2] sm:$0x1]
    %v100 = vlaneseq
    %v101 = vshrl.u32 %v100, 7
    %v102 = vsub.s32 0, %v101
    %v103 = vrot.slane %v98, %v102
    %v121 = vunpack.c.l.b16 %v82
    %v122 = vunpack.c.l.b16 %v83
    %v123 = vunpack.c.l.b16 %v84
    %v124 = vunpack.c.l.b16 %v85
    %v125 = vunpack.c.l.b16 %v86
    %v126 = vunpack.c.l.b16 %v87
    %v127 = vunpack.c.l.b16 %v88
    %v128 = vunpack.c.l.b16 %v89
    %v129 = vunpack.c.l.b16 %v90
    %v130 = vunpack.c.l.b16 %v91
    %v131 = vunpack.c.l.b16 %v92
    %v132 = vunpack.c.l.b16 %v93
    %v133 = vunpack.c.l.b16 %v94
    %v134 = vunpack.c.l.b16 %v95
    %v135 = vunpack.c.l.b16 %v96
    %v136 = vunpack.c.l.b16 %v97
    %v137 = vpack.c.b16 %v122, %v121
    %v138 = vpack.c.b16 %v124, %v123
    %v139 = vpack.c.b16 %v126, %v125
    %v140 = vpack.c.b16 %v128, %v127
    %v141 = vpack.c.b16 %v130, %v129
    %v142 = vpack.c.b16 %v132, %v131
    %v143 = vpack.c.b16 %v134, %v133
    %v144 = vpack.c.b16 %v136, %v135
    %153 = vmatprep.subr.bf16.mxu0 0
    %154 = vmatpush1.bf16.msra.mxu0 %v144
    %155 = vmatprep.subr.bf16.mxu0 0
    %156 = vmatpush1.bf16.msra.mxu0 %v143
    %157 = vmatprep.subr.bf16.mxu0 0
    %158 = vmatpush1.bf16.msra.mxu0 %v142
    %159 = vmatprep.subr.bf16.mxu0 0
    %160 = vmatpush1.bf16.msra.mxu0 %v141
    %161 = vmatprep.subr.bf16.mxu0 0
    %162 = vmatpush1.bf16.msra.mxu0 %v140
    %163 = vmatprep.subr.bf16.mxu0 0
    %164 = vmatpush1.bf16.msra.mxu0 %v139
    %165 = vmatprep.subr.bf16.mxu0 0
    %166 = vmatpush1.bf16.msra.mxu0 %v138
    %167 = vmatprep.subr.bf16.mxu0 0
    %168 = vmatpush1.bf16.msra.mxu0 %v137
    %169 = vmatprep.subr.bf16.mxu0 0
    %170 = vmatpush2.bf16.msra.mxu0 0
    %171 = vmatprep.subr.bf16.mxu0 0
    %172 = vmatpush2.bf16.msra.mxu0 0
    %173 = vmatprep.subr.bf16.mxu0 0
    %174 = vmatpush2.bf16.msra.mxu0 0
    %175 = vmatprep.subr.bf16.mxu0 0
    %176 = vmatpush2.bf16.msra.mxu0 0
    %177 = vmatprep.subr.bf16.mxu0 0
    %178 = vmatpush2.bf16.msra.mxu0 0
    %179 = vmatprep.subr.bf16.mxu0 0
    %180 = vmatpush2.bf16.msra.mxu0 0
    %181 = vmatprep.subr.bf16.mxu0 0
    %182 = vmatpush2.bf16.msra.mxu0 0
    %183 = vmatprep.subr.bf16.mxu0 0
    %184 = vmatpush2.bf16.msra.mxu0 0
    %185 = vmatprep.mubr.bf16.mxu0 0
    %186 = vmatmul.mubr.bf16.gmra.mxu0 %v81
    %v187 = vpop.f32.mrf.mxu0
    %v188 = vadd.f32 %v103, %v187
    %v189 = vpop.f32.mrf.mxu0
    %v190 = vpop.f32.mrf.mxu0
    %v191 = vpop.f32.mrf.mxu0
    %192 = vdwg.mxu0
    %vm193 = vcmp.gt.f32.partialorder %v188, 0.0
    %v194 = vmul.f32 %v188, 0.01
    %v195 = vsel %vm193, %v188, %v194
    %v196 = vpack.c.bf16 %v195, %v195
    %v197 = vld [vmem:[#allocation7] sm:$0xf]
    %v198 = vld [vmem:[#allocation7 + $0x4] sm:$0xf]
    %v199 = vld [vmem:[#allocation7 + $0x8] sm:$0xf]
    %v200 = vld [vmem:[#allocation7 + $0xc] sm:$0xf]
    %v201 = vld [vmem:[#allocation7 + $0x10] sm:$0xf]
    %v202 = vld [vmem:[#allocation7 + $0x14] sm:$0xf]
    %v203 = vld [vmem:[#allocation7 + $0x18] sm:$0xf]
    %v204 = vld [vmem:[#allocation7 + $0x1c] sm:$0xf]
    %v205 = vld [vmem:[#allocation7 + $0x20] sm:$0xf]
    %v206 = vld [vmem:[#allocation7 + $0x24] sm:$0xf]
    %v207 = vld [vmem:[#allocation7 + $0x28] sm:$0xf]
    %v208 = vld [vmem:[#allocation7 + $0x2c] sm:$0xf]
    %v209 = vld [vmem:[#allocation7 + $0x30] sm:$0xf]
    %v210 = vld [vmem:[#allocation7 + $0x34] sm:$0xf]
    %v211 = vld [vmem:[#allocation7 + $0x38] sm:$0xf]
    %v212 = vld [vmem:[#allocation7 + $0x3c] sm:$0xf]
    %v213 = vld [vmem:[%s4] sm:$0x1]
    %v215 = vlaneseq
    %v216 = vshrl.u32 %v215, 7
    %v217 = vsub.s32 0, %v216
    %v218 = vrot.slane %v213, %v217
    %v236 = vunpack.c.l.b16 %v197
    %v237 = vunpack.c.l.b16 %v198
    %v238 = vunpack.c.l.b16 %v199
    %v239 = vunpack.c.l.b16 %v200
    %v240 = vunpack.c.l.b16 %v201
    %v241 = vunpack.c.l.b16 %v202
    %v242 = vunpack.c.l.b16 %v203
    %v243 = vunpack.c.l.b16 %v204
    %v244 = vunpack.c.l.b16 %v205
    %v245 = vunpack.c.l.b16 %v206
    %v246 = vunpack.c.l.b16 %v207
    %v247 = vunpack.c.l.b16 %v208
    %v248 = vunpack.c.l.b16 %v209
    %v249 = vunpack.c.l.b16 %v210
    %v250 = vunpack.c.l.b16 %v211
    %v251 = vunpack.c.l.b16 %v212
    %v252 = vpack.c.b16 %v237, %v236
    %v253 = vpack.c.b16 %v239, %v238
    %v254 = vpack.c.b16 %v241, %v240
    %v255 = vpack.c.b16 %v243, %v242
    %v256 = vpack.c.b16 %v245, %v244
    %v257 = vpack.c.b16 %v247, %v246
    %v258 = vpack.c.b16 %v249, %v248
    %v259 = vpack.c.b16 %v251, %v250
    %268 = vmatprep.subr.bf16.mxu0 0
    %269 = vmatpush1.bf16.msra.mxu0 %v259
    %270 = vmatprep.subr.bf16.mxu0 0
    %271 = vmatpush1.bf16.msra.mxu0 %v258
    %272 = vmatprep.subr.bf16.mxu0 0
    %273 = vmatpush1.bf16.msra.mxu0 %v257
    %274 = vmatprep.subr.bf16.mxu0 0
    %275 = vmatpush1.bf16.msra.mxu0 %v256
    %276 = vmatprep.subr.bf16.mxu0 0
    %277 = vmatpush1.bf16.msra.mxu0 %v255
    %278 = vmatprep.subr.bf16.mxu0 0
    %279 = vmatpush1.bf16.msra.mxu0 %v254
    %280 = vmatprep.subr.bf16.mxu0 0
    %281 = vmatpush1.bf16.msra.mxu0 %v253
    %282 = vmatprep.subr.bf16.mxu0 0
    %283 = vmatpush1.bf16.msra.mxu0 %v252
    %284 = vmatprep.subr.bf16.mxu0 0
    %285 = vmatpush2.bf16.msra.mxu0 0
    %286 = vmatprep.subr.bf16.mxu0 0
    %287 = vmatpush2.bf16.msra.mxu0 0
    %288 = vmatprep.subr.bf16.mxu0 0
    %289 = vmatpush2.bf16.msra.mxu0 0
    %290 = vmatprep.subr.bf16.mxu0 0
    %291 = vmatpush2.bf16.msra.mxu0 0
    %292 = vmatprep.subr.bf16.mxu0 0
    %293 = vmatpush2.bf16.msra.mxu0 0
    %294 = vmatprep.subr.bf16.mxu0 0
    %295 = vmatpush2.bf16.msra.mxu0 0
    %296 = vmatprep.subr.bf16.mxu0 0
    %297 = vmatpush2.bf16.msra.mxu0 0
    %298 = vmatprep.subr.bf16.mxu0 0
    %299 = vmatpush2.bf16.msra.mxu0 0
    %300 = vmatprep.mubr.bf16.mxu0 0
    %301 = vmatmul.mubr.bf16.gmra.mxu0 %v196
    %v302 = vpop.f32.mrf.mxu0
    %v303 = vadd.f32 %v218, %v302
    %v304 = vpop.f32.mrf.mxu0
    %v305 = vpop.f32.mrf.mxu0
    %v306 = vpop.f32.mrf.mxu0
    %307 = vdwg.mxu0
    %vm308 = vcmp.gt.f32.partialorder %v303, 0.0
    %v309 = vmul.f32 %v303, 0.01
    %v310 = vsel %vm308, %v303, %v309
    %v311 = vpack.c.bf16 %v310, %v310
    %v312 = vld [vmem:[#allocation8] sm:$0xf]
    %v313 = vld [vmem:[#allocation8 + $0x4] sm:$0xf]
    %v314 = vld [vmem:[#allocation8 + $0x8] sm:$0xf]
    %v315 = vld [vmem:[#allocation8 + $0xc] sm:$0xf]
    %v316 = vld [vmem:[#allocation8 + $0x10] sm:$0xf]
    %v317 = vld [vmem:[#allocation8 + $0x14] sm:$0xf]
    %v318 = vld [vmem:[#allocation8 + $0x18] sm:$0xf]
    %v319 = vld [vmem:[#allocation8 + $0x1c] sm:$0xf]
    %v320 = vld [vmem:[#allocation8 + $0x20] sm:$0xf]
    %v321 = vld [vmem:[#allocation8 + $0x24] sm:$0xf]
    %v322 = vld [vmem:[#allocation8 + $0x28] sm:$0xf]
    %v323 = vld [vmem:[#allocation8 + $0x2c] sm:$0xf]
    %v324 = vld [vmem:[#allocation8 + $0x30] sm:$0xf]
    %v325 = vld [vmem:[#allocation8 + $0x34] sm:$0xf]
    %v326 = vld [vmem:[#allocation8 + $0x38] sm:$0xf]
    %v327 = vld [vmem:[#allocation8 + $0x3c] sm:$0xf]
    %v328 = vld [vmem:[%s6] sm:$0x1]
    %v330 = vlaneseq
    %v331 = vshrl.u32 %v330, 7
    %v332 = vsub.s32 0, %v331
    %v333 = vrot.slane %v328, %v332
    %v351 = vunpack.c.l.b16 %v312
    %v352 = vunpack.c.l.b16 %v313
    %v353 = vunpack.c.l.b16 %v314
    %v354 = vunpack.c.l.b16 %v315
    %v355 = vunpack.c.l.b16 %v316
    %v356 = vunpack.c.l.b16 %v317
    %v357 = vunpack.c.l.b16 %v318
    %v358 = vunpack.c.l.b16 %v319
    %v359 = vunpack.c.l.b16 %v320
    %v360 = vunpack.c.l.b16 %v321
    %v361 = vunpack.c.l.b16 %v322
    %v362 = vunpack.c.l.b16 %v323
    %v363 = vunpack.c.l.b16 %v324
    %v364 = vunpack.c.l.b16 %v325
    %v365 = vunpack.c.l.b16 %v326
    %v366 = vunpack.c.l.b16 %v327
    %v367 = vpack.c.b16 %v352, %v351
    %v368 = vpack.c.b16 %v354, %v353
    %v369 = vpack.c.b16 %v356, %v355
    %v370 = vpack.c.b16 %v358, %v357
    %v371 = vpack.c.b16 %v360, %v359
    %v372 = vpack.c.b16 %v362, %v361
    %v373 = vpack.c.b16 %v364, %v363
    %v374 = vpack.c.b16 %v366, %v365
    %383 = vmatprep.subr.bf16.mxu0 0
    %384 = vmatpush1.bf16.msra.mxu0 %v374
    %385 = vmatprep.subr.bf16.mxu0 0
    %386 = vmatpush1.bf16.msra.mxu0 %v373
    %387 = vmatprep.subr.bf16.mxu0 0
    %388 = vmatpush1.bf16.msra.mxu0 %v372
    %389 = vmatprep.subr.bf16.mxu0 0
    %390 = vmatpush1.bf16.msra.mxu0 %v371
    %391 = vmatprep.subr.bf16.mxu0 0
    %392 = vmatpush1.bf16.msra.mxu0 %v370
    %393 = vmatprep.subr.bf16.mxu0 0
    %394 = vmatpush1.bf16.msra.mxu0 %v369
    %395 = vmatprep.subr.bf16.mxu0 0
    %396 = vmatpush1.bf16.msra.mxu0 %v368
    %397 = vmatprep.subr.bf16.mxu0 0
    %398 = vmatpush1.bf16.msra.mxu0 %v367
    %399 = vmatprep.subr.bf16.mxu0 0
    %400 = vmatpush2.bf16.msra.mxu0 0
    %401 = vmatprep.subr.bf16.mxu0 0
    %402 = vmatpush2.bf16.msra.mxu0 0
    %403 = vmatprep.subr.bf16.mxu0 0
    %404 = vmatpush2.bf16.msra.mxu0 0
    %405 = vmatprep.subr.bf16.mxu0 0
    %406 = vmatpush2.bf16.msra.mxu0 0
    %407 = vmatprep.subr.bf16.mxu0 0
    %408 = vmatpush2.bf16.msra.mxu0 0
    %409 = vmatprep.subr.bf16.mxu0 0
    %410 = vmatpush2.bf16.msra.mxu0 0
    %411 = vmatprep.subr.bf16.mxu0 0
    %412 = vmatpush2.bf16.msra.mxu0 0
    %413 = vmatprep.subr.bf16.mxu0 0
    %414 = vmatpush2.bf16.msra.mxu0 0
    %415 = vmatprep.mubr.bf16.mxu0 0
    %416 = vmatmul.mubr.bf16.gmra.mxu0 %v311
    %v417 = vpop.f32.mrf.mxu0
    %v418 = vadd.f32 %v333, %v417
    %v419 = vpop.f32.mrf.mxu0
    %v420 = vpop.f32.mrf.mxu0
    %v421 = vpop.f32.mrf.mxu0
    %422 = vdwg.mxu0
    %423 = vst [vmem:[#allocation10] sm:$0xff] %v418
    // Predicated region
    $region46: #{tpu_custom_call.1} parent=1 // pred_check
      _
    $region47: #{tpu_custom_call.1} parent=1 // pred_check_branch
      %425 = sbr.rel (0) target = $region49
    $region48: #{tpu_custom_call.1} parent=1 // pred_region
      %s427 = ssub.s32 128, 128
      %428 = vsyncadd [#allocation4], %s427
      %s430 = sshll.u32 [#allocation10], 4
      %s431 = int_to_ptr.vmem [resolvable:$true] %s430
      %433 = dma.vmem_to_hbm [thread:$0]  %s431, 128, %s7, [#allocation4]
    $region49: #{tpu_custom_call.1} parent=1 // pred_fallthru
      _
    // Predicated region
    $region50: #{tpu_custom_call.1} parent=1 // pred_check
      _
    $region51: #{tpu_custom_call.1} parent=1 // pred_check_branch
      %435 = sbr.rel (0) target = $region53
    $region52: #{tpu_custom_call.1} parent=1 // pred_region
      %436 = dma.done [#allocation4], 128
    $region53: #{tpu_custom_call.1} parent=1 // pred_fallthru
      _
    %437 = vsyncpa [#allocation3], 1
    %438 = vsyncpa [#allocation6], 1
    %439 = vsyncpa [#allocation9], 1
    %440 = vsyncpa [#allocation4], 1

</llo_original>
